<compile_context>
chip_gen: v7x
topology: tpu7x:2x2x1
jax: 0.10.0
libtpu: 0.0.40
codegen_flags: <defaults>
</compile_context>

<pallas_src>
import functools

import jax
import jax.numpy as jnp
from jax.experimental import pallas as pl
from jax.experimental.pallas import tpu as pltpu

HIDDEN = 16          # config['hidden_size'] = 4 * 4
FFN = HIDDEN * 4     # 64
BATCH = 4            # config['batch_size']
SEQ = 8              # config['seq_length']

_INV_SQRT2 = 0.7071067811865476


def _gelu_exact(x):
    # torch.nn.GELU() default: exact erf-based GELU
    return 0.5 * x * (1.0 + jax.lax.erf(x * jnp.float32(_INV_SQRT2)))


def mlp_kernel(x_ref, buf_ref, w1_ref, b1_ref, w2_ref, o_ref):
    # buffer add: broadcast (1, H) over (tm, H) — VPU add, hidden under MXU/DMA
    x = x_ref[...] + buf_ref[...]
    # fc1: x @ W1 + b1 on the MXU, f32 accumulation
    h = jnp.dot(x, w1_ref[...], preferred_element_type=jnp.float32) + b1_ref[...]
    # exact GELU (matches torch.nn.GELU() default)
    h = _gelu_exact(h)
    # fc2: h @ W2 (no bias)
    o_ref[...] = jnp.dot(h, w2_ref[...], preferred_element_type=jnp.float32)


def _pick_row_tile(m):
    # Largest row tile that divides M; keeps blocks (8,*)-aligned when possible.
    for tm in (512, 256, 128, 64, 32, 16, 8):
        if m % tm == 0:
            return tm
    return m  # tiny / odd M: single block, full extent


@functools.partial(jax.jit, static_argnames=())
def mlp_forward(x, buf, w1, b1, w2):
    """x: (B, S, H) float32 -> (B, S, H) float32"""
    B, S, H = x.shape
    M = B * S
    x2d = x.reshape(M, H).astype(jnp.float32)
    buf2d = buf.reshape(1, H).astype(jnp.float32)
    b1_2d = b1.reshape(1, FFN).astype(jnp.float32)

    tm = _pick_row_tile(M)
    grid = (M // tm,)

    out = pl.pallas_call(
        mlp_kernel,
        out_shape=jax.ShapeDtypeStruct((M, H), jnp.float32),
        grid=grid,
        in_specs=[
            pl.BlockSpec((tm, H), lambda i: (i, 0)),     # x rows, tiled over M
            pl.BlockSpec((1, H), lambda i: (0, 0)),      # buf (broadcast)
            pl.BlockSpec((H, FFN), lambda i: (0, 0)),    # W1 (resident)
            pl.BlockSpec((1, FFN), lambda i: (0, 0)),    # b1 (resident)
            pl.BlockSpec((FFN, H), lambda i: (0, 0)),    # W2 (resident)
        ],
        out_specs=pl.BlockSpec((tm, H), lambda i: (i, 0)),
        compiler_params=pltpu.CompilerParams(
            dimension_semantics=("parallel",),           # shards M across TCs (v7x)
        ),
    )(x2d, buf2d, w1, b1_2d, w2)

    return out.reshape(B, S, H)


if __name__ == "__main__":
    key = jax.random.PRNGKey(0)
    kx, k1, kb1, k2 = jax.random.split(key, 4)

    # Deterministic inputs / parameters (shapes match the torch module).
    x = jax.random.normal(kx, (BATCH, SEQ, HIDDEN), dtype=jnp.float32)
    buf = jnp.ones((HIDDEN,), dtype=jnp.float32)                         # register_buffer ones
    w1 = jax.random.normal(k1, (HIDDEN, FFN), dtype=jnp.float32) * 0.1   # fc1.weight.T
    b1 = jax.random.normal(kb1, (FFN,), dtype=jnp.float32) * 0.1         # fc1.bias
    w2 = jax.random.normal(k2, (FFN, HIDDEN), dtype=jnp.float32) * 0.1   # fc2.weight.T

    out = mlp_forward(x, buf, w1, b1, w2)
    out = jax.block_until_ready(out)

    # Pure-JAX reference, computed exactly as the torch module does it.
    xr = x + buf
    hr = _gelu_exact(xr @ w1 + b1)
    ref = hr @ w2
    assert out.shape == (BATCH, SEQ, HIDDEN)
    assert jnp.allclose(out, ref, atol=1e-5, rtol=1e-5), "mismatch vs reference"

    print("KERNEL_OK")
</pallas_src>

<mosaic_0001>
module attributes {stable_mosaic.version = 11 : i64} {
  func.func @mlp_kernel(%arg0: i32, %arg1: memref<32x16xf32, #tpu.memory_space<vmem>>, %arg2: memref<1x16xf32, #tpu.memory_space<vmem>>, %arg3: memref<16x64xf32, #tpu.memory_space<vmem>>, %arg4: memref<1x64xf32, #tpu.memory_space<vmem>>, %arg5: memref<64x16xf32, #tpu.memory_space<vmem>>, %arg6: memref<32x16xf32, #tpu.memory_space<vmem>>) attributes {dimension_semantics = [#tpu.dimension_semantics<parallel>], iteration_bounds = array<i64: 1>, scalar_prefetch = 0 : i64, scratch_operands = 0 : i64, tpu.core_type = #tpu.core_type<tc>, window_params = [{transform_indices = @transform_0, window_bounds = array<i64: 32, 16>}, {pipeline_mode = #tpu.pipeline_mode<synchronous>, transform_indices = @transform_1, window_bounds = array<i64: 1, 16>}, {pipeline_mode = #tpu.pipeline_mode<synchronous>, transform_indices = @transform_2, window_bounds = array<i64: 16, 64>}, {pipeline_mode = #tpu.pipeline_mode<synchronous>, transform_indices = @transform_3, window_bounds = array<i64: 1, 64>}, {pipeline_mode = #tpu.pipeline_mode<synchronous>, transform_indices = @transform_4, window_bounds = array<i64: 64, 16>}, {transform_indices = @transform_5, window_bounds = array<i64: 32, 16>}]} {
    %c0 = arith.constant 0 : index
    %c0_0 = arith.constant 0 : index
    %0 = vector.load %arg1[%c0, %c0_0] : memref<32x16xf32, #tpu.memory_space<vmem>>, vector<32x16xf32>
    %c0_1 = arith.constant 0 : index
    %c0_2 = arith.constant 0 : index
    %1 = vector.load %arg2[%c0_1, %c0_2] : memref<1x16xf32, #tpu.memory_space<vmem>>, vector<1x16xf32>
    %2 = vector.broadcast %1 : vector<1x16xf32> to vector<32x16xf32>
    %3 = arith.addf %0, %2 : vector<32x16xf32>
    %c0_3 = arith.constant 0 : index
    %c0_4 = arith.constant 0 : index
    %4 = vector.load %arg3[%c0_3, %c0_4] : memref<16x64xf32, #tpu.memory_space<vmem>>, vector<16x64xf32>
    %cst = arith.constant dense<0.000000e+00> : vector<32x64xf32>
    %5 = tpu.matmul %3, %4, %cst {dimension_numbers = #tpu.dot_dimension_numbers<[1], [0], [0], [1], [0, 0, 1, 1], [], []>} : vector<32x16xf32>, vector<16x64xf32>, vector<32x64xf32> -> vector<32x64xf32>
    %c0_5 = arith.constant 0 : index
    %c0_6 = arith.constant 0 : index
    %6 = vector.load %arg4[%c0_5, %c0_6] : memref<1x64xf32, #tpu.memory_space<vmem>>, vector<1x64xf32>
    %7 = vector.broadcast %6 : vector<1x64xf32> to vector<32x64xf32>
    %8 = arith.addf %5, %7 : vector<32x64xf32>
    %cst_7 = arith.constant 5.000000e-01 : f32
    %9 = vector.broadcast %cst_7 : f32 to vector<32x64xf32>
    %10 = arith.mulf %9, %8 : vector<32x64xf32>
    %cst_8 = arith.constant 0.707106769 : f32
    %11 = vector.broadcast %cst_8 : f32 to vector<32x64xf32>
    %12 = arith.mulf %8, %11 : vector<32x64xf32>
    %13 = math.erf %12 : vector<32x64xf32>
    %cst_9 = arith.constant 1.000000e+00 : f32
    %14 = vector.broadcast %cst_9 : f32 to vector<32x64xf32>
    %15 = arith.addf %14, %13 : vector<32x64xf32>
    %16 = arith.mulf %10, %15 : vector<32x64xf32>
    %c0_10 = arith.constant 0 : index
    %c0_11 = arith.constant 0 : index
    %17 = vector.load %arg5[%c0_10, %c0_11] : memref<64x16xf32, #tpu.memory_space<vmem>>, vector<64x16xf32>
    %cst_12 = arith.constant dense<0.000000e+00> : vector<32x16xf32>
    %18 = tpu.matmul %16, %17, %cst_12 {dimension_numbers = #tpu.dot_dimension_numbers<[1], [0], [0], [1], [0, 0, 1, 1], [], []>} : vector<32x64xf32>, vector<64x16xf32>, vector<32x16xf32> -> vector<32x16xf32>
    %c0_13 = arith.constant 0 : index
    %c0_14 = arith.constant 0 : index
    %19 = vector.load %arg6[%c0_13, %c0_14] : memref<32x16xf32, #tpu.memory_space<vmem>>, vector<32x16xf32>
    tpu.vector_store %arg6[%c0_13, %c0_14], %18 {strides = array<i32>} : memref<32x16xf32, #tpu.memory_space<vmem>>, vector<32x16xf32>,
    return
  }
  func.func @transform_0(%arg0: i32) -> (i32, i32) {
    %c0_i32 = arith.constant 0 : i32
    %c0_i32_0 = arith.constant 0 : i32
    return %arg0, %c0_i32 : i32, i32
  }
  func.func @transform_1(%arg0: i32) -> (i32, i32) {
    %c0_i32 = arith.constant 0 : i32
    %c0_i32_0 = arith.constant 0 : i32
    %c0_i32_1 = arith.constant 0 : i32
    return %c0_i32, %c0_i32_0 : i32, i32
  }
  func.func @transform_2(%arg0: i32) -> (i32, i32) {
    %c0_i32 = arith.constant 0 : i32
    %c0_i32_0 = arith.constant 0 : i32
    %c0_i32_1 = arith.constant 0 : i32
    return %c0_i32, %c0_i32_0 : i32, i32
  }
  func.func @transform_3(%arg0: i32) -> (i32, i32) {
    %c0_i32 = arith.constant 0 : i32
    %c0_i32_0 = arith.constant 0 : i32
    %c0_i32_1 = arith.constant 0 : i32
    return %c0_i32, %c0_i32_0 : i32, i32
  }
  func.func @transform_4(%arg0: i32) -> (i32, i32) {
    %c0_i32 = arith.constant 0 : i32
    %c0_i32_0 = arith.constant 0 : i32
    %c0_i32_1 = arith.constant 0 : i32
    return %c0_i32, %c0_i32_0 : i32, i32
  }
  func.func @transform_5(%arg0: i32) -> (i32, i32) {
    %c0_i32 = arith.constant 0 : i32
    %c0_i32_0 = arith.constant 0 : i32
    return %arg0, %c0_i32 : i32, i32
  }
}

</mosaic_0001>

<llo_original>
// kernel: mlp_forward.1
$region0: #{mlp_forward.1}
  #allocation0 [shape = 'u32[]', space=smem, size = 0x4, offset = 0x4, fixed_abs, tag = 'smem constant byte address 0x4 - core index']
  #allocation1 [shape = 'u32[144,128]{1,0:T(1,128)}', space=vmem, size = 0x12000, scoped, tag = 'internal scratch']
  %s0 = inlined_call_operand.vmem [shape: f32[32,16], index: 0, kind: input, shape index: {}]
  %s1 = inlined_call_operand.vmem [shape: f32[1,16], index: 1, kind: input, shape index: {}]
  %s2 = inlined_call_operand.vmem [shape: f32[16,64], index: 2, kind: input, shape index: {}]
  %s3 = inlined_call_operand.vmem [shape: f32[1,64], index: 3, kind: input, shape index: {}]
  %s4 = inlined_call_operand.vmem [shape: f32[64,16], index: 4, kind: input, shape index: {}]
  %s5 = inlined_call_operand.hbm [shape: f32[32,16], index: 5, kind: output, shape index: {}]
  %s6 = sld [smem:[#allocation0]]
  $region30: #{mlp_forward.1} parent=0
    _
  %s8 = ssub.s32 1, %s6
  %s9 = scalar_select 0, %s8, %s6
  $region1: #{mlp_forward.1} parent=0
    #allocation2 [shape = 'u8[16384]{0}', space=vmem, size = 0x4000, scoped, tag = 'output window, operand 0, single buffered']
    #allocation3 [shape = 's32[1]{0}', space=sflag, size = 0x4, scoped, tag = 'scoped memory for mlp_forward.1']
    %10 = vsyncpa [#allocation3], 0
    // Predicated region
    $region2: #{mlp_forward.1} parent=1 // pred_check
      _
    $region3: #{mlp_forward.1} parent=1 // pred_check_branch
      %12 = sbr.rel (0) target = $region5
    $region4: #{mlp_forward.1} parent=1 // pred_region
      _
    $region5: #{mlp_forward.1} parent=1 // pred_fallthru
      _
    // Predicated region
    $region6: #{mlp_forward.1} parent=1 // pred_check
      _
    $region7: #{mlp_forward.1} parent=1 // pred_check_branch
      %14 = sbr.rel (0) target = $region9
    $region8: #{mlp_forward.1} parent=1 // pred_region
      _
    $region9: #{mlp_forward.1} parent=1 // pred_fallthru
      _
    // Predicated region
    $region10: #{mlp_forward.1} parent=1 // pred_check
      _
    $region11: #{mlp_forward.1} parent=1 // pred_check_branch
      %16 = sbr.rel (0) target = $region13
    $region12: #{mlp_forward.1} parent=1 // pred_region
      _
    $region13: #{mlp_forward.1} parent=1 // pred_fallthru
      _
    // Predicated region
    $region14: #{mlp_forward.1} parent=1 // pred_check
      _
    $region15: #{mlp_forward.1} parent=1 // pred_check_branch
      %18 = sbr.rel (0) target = $region17
    $region16: #{mlp_forward.1} parent=1 // pred_region
      _
    $region17: #{mlp_forward.1} parent=1 // pred_fallthru
      _
    // Predicated region
    $region18: #{mlp_forward.1} parent=1 // pred_check
      _
    $region19: #{mlp_forward.1} parent=1 // pred_check_branch
      %20 = sbr.rel (0) target = $region21
    $region20: #{mlp_forward.1} parent=1 // pred_region
      _
    $region21: #{mlp_forward.1} parent=1 // pred_fallthru
      _
    %v21 = vld [vmem:[%s0] sm:$0xff]
    %v22 = vld [vmem:[%s0 + $0x8] sm:$0xff]
    %v23 = vld [vmem:[%s0 + $0x10] sm:$0xff]
    %v24 = vld [vmem:[%s0 + $0x18] sm:$0xff]
    %v25 = vld [vmem:[%s1] sm:$0x1]
    %v27 = vlaneseq
    %v28 = vshrl.u32 %v27, 7
    %v29 = vsub.s32 0, %v28
    %v30 = vrot.slane %v25, %v29
    %v32 = vadd.f32 %v21, %v30
    %v33 = vadd.f32 %v22, %v30
    %v34 = vadd.f32 %v23, %v30
    %v35 = vadd.f32 %v24, %v30
    %v36 = vld [vmem:[%s2] sm:$0xff]
    %v37 = vld [vmem:[%s2 + $0x8] sm:$0xff]
    %v38 = vld [vmem:[%s3] sm:$0x1]
    %v40 = vlaneseq
    %v41 = vshrl.u32 %v40, 7
    %v42 = vsub.s32 0, %v41
    %v43 = vrot.slane %v38, %v42
    %vm45 = vcmask 130048
    %v47 = vsel %vm45, %v32, 0
    %v50 = vsel %vm45, %v33, 0
    %v53 = vsel %vm45, %v34, 0
    %v56 = vsel %vm45, %v35, 0
    %58 = vmatprep.subr.mxu0 0.0
    %59 = vmatpush1.msra.mxu0 %v36
    %60 = vmatprep.subr.mxu0 0.0
    %61 = vmatpush1.msra.mxu0 %v37
    %62 = vmatprep.subr.mxu0 0.0
    %63 = vmatpush1.msra.mxu0 0.0
    %64 = vmatprep.subr.mxu0 0.0
    %65 = vmatpush1.msra.mxu0 0.0
    %66 = vmatprep.subr.mxu0 0.0
    %67 = vmatpush1.msra.mxu0 0.0
    %68 = vmatprep.subr.mxu0 0.0
    %69 = vmatpush1.msra.mxu0 0.0
    %70 = vmatprep.subr.mxu0 0.0
    %71 = vmatpush1.msra.mxu0 0.0
    %72 = vmatprep.subr.mxu0 0.0
    %73 = vmatpush1.msra.mxu0 0.0
    %74 = vmatprep.subr.mxu0 0.0
    %75 = vmatpush1.msra.mxu0 0.0
    %76 = vmatprep.subr.mxu0 0.0
    %77 = vmatpush1.msra.mxu0 0.0
    %78 = vmatprep.subr.mxu0 0.0
    %79 = vmatpush1.msra.mxu0 0.0
    %80 = vmatprep.subr.mxu0 0.0
    %81 = vmatpush1.msra.mxu0 0.0
    %82 = vmatprep.subr.mxu0 0.0
    %83 = vmatpush1.msra.mxu0 0.0
    %84 = vmatprep.subr.mxu0 0.0
    %85 = vmatpush1.msra.mxu0 0.0
    %86 = vmatprep.subr.mxu0 0.0
    %87 = vmatpush1.msra.mxu0 0.0
    %88 = vmatprep.subr.mxu0 0.0
    %89 = vmatpush1.msra.mxu0 0.0
    %90 = vmatprep.subr.mxu0 0.0
    %91 = vmatpush1.msra.mxu0 0.0
    %92 = vmatprep.subr.mxu0 0.0
    %93 = vmatpush1.msra.mxu0 0.0
    %94 = vmatprep.subr.mxu0 0.0
    %95 = vmatpush1.msra.mxu0 0.0
    %96 = vmatprep.subr.mxu0 0.0
    %97 = vmatpush1.msra.mxu0 0.0
    %98 = vmatprep.subr.mxu0 0.0
    %99 = vmatpush1.msra.mxu0 0.0
    %100 = vmatprep.subr.mxu0 0.0
    %101 = vmatpush1.msra.mxu0 0.0
    %102 = vmatprep.subr.mxu0 0.0
    %103 = vmatpush1.msra.mxu0 0.0
    %104 = vmatprep.subr.mxu0 0.0
    %105 = vmatpush1.msra.mxu0 0.0
    %106 = vmatprep.subr.mxu0 0.0
    %107 = vmatpush1.msra.mxu0 0.0
    %108 = vmatprep.subr.mxu0 0.0
    %109 = vmatpush1.msra.mxu0 0.0
    %110 = vmatprep.subr.mxu0 0.0
    %111 = vmatpush1.msra.mxu0 0.0
    %112 = vmatprep.subr.mxu0 0.0
    %113 = vmatpush1.msra.mxu0 0.0
    %114 = vmatprep.subr.mxu0 0.0
    %115 = vmatpush1.msra.mxu0 0.0
    %116 = vmatprep.subr.mxu0 0.0
    %117 = vmatpush1.msra.mxu0 0.0
    %118 = vmatprep.subr.mxu0 0.0
    %119 = vmatpush1.msra.mxu0 0.0
    %120 = vmatprep.subr.mxu0 0.0
    %121 = vmatpush1.msra.mxu0 0.0
    %122 = vmatprep.mubr.f32.mxu0 0.0
    %123 = vmatmul.mubr.f32.gmra.mrb[0].mxu0 %v47
    %v124 = vpop.f32.mrb[0].mxu0
    %v125 = vadd.f32 %v43, %v124
    %v126 = vpop.f32.mrb[0].mxu0
    %127 = vmatprep.mubr.f32.mxu0 0.0
    %128 = vmatmul.mubr.f32.gmra.mrb[0].mxu0 %v50
    %v129 = vpop.f32.mrb[0].mxu0
    %v130 = vadd.f32 %v43, %v129
    %v131 = vpop.f32.mrb[0].mxu0
    %132 = vmatprep.mubr.f32.mxu0 0.0
    %133 = vmatmul.mubr.f32.gmra.mrb[0].mxu0 %v53
    %v134 = vpop.f32.mrb[0].mxu0
    %v135 = vadd.f32 %v43, %v134
    %v136 = vpop.f32.mrb[0].mxu0
    %137 = vmatprep.mubr.f32.mxu0 0.0
    %138 = vmatmul.mubr.f32.gmra.mrb[0].mxu0 %v56
    %v139 = vpop.f32.mrb[0].mxu0
    %v140 = vadd.f32 %v43, %v139
    %v141 = vpop.f32.mrb[0].mxu0
    %142 = vdwg.mxu0
    %v143 = vmul.f32 %v125, 0.5
    %v144 = vmul.f32 %v130, 0.5
    %v145 = vmul.f32 %v135, 0.5
    %v146 = vmul.f32 %v140, 0.5
    %v147 = vmul.f32 %v125, 0.70710677
    %v148 = vmul.f32 %v130, 0.70710677
    %v149 = vmul.f32 %v135, 0.70710677
    %v150 = vmul.f32 %v140, 0.70710677
    %v151 = verf.f32.pop %v147
    %v152 = verf.f32.pop %v148
    %v153 = verf.f32.pop %v149
    %v154 = verf.f32.pop %v150
    %v155 = vadd.f32 %v151, 1.0
    %v156 = vadd.f32 %v152, 1.0
    %v157 = vadd.f32 %v153, 1.0
    %v158 = vadd.f32 %v154, 1.0
    %v159 = vmul.f32 %v143, %v155
    %v160 = vmul.f32 %v144, %v156
    %v161 = vmul.f32 %v145, %v157
    %v162 = vmul.f32 %v146, %v158
    %v163 = vld [vmem:[%s4] sm:$0xff]
    %v164 = vld [vmem:[%s4 + $0x8] sm:$0xff]
    %v165 = vld [vmem:[%s4 + $0x10] sm:$0xff]
    %v166 = vld [vmem:[%s4 + $0x18] sm:$0xff]
    %v167 = vld [vmem:[%s4 + $0x20] sm:$0xff]
    %v168 = vld [vmem:[%s4 + $0x28] sm:$0xff]
    %v169 = vld [vmem:[%s4 + $0x30] sm:$0xff]
    %v170 = vld [vmem:[%s4 + $0x38] sm:$0xff]
    %vm171 = vcmask 523264
    %v173 = vsel %vm171, %v159, 0
    %v176 = vsel %vm171, %v160, 0
    %v179 = vsel %vm171, %v161, 0
    %v182 = vsel %vm171, %v162, 0
    %184 = vmatprep.subr.mxu0 0.0
    %185 = vmatpush1.msra.mxu0 %v163
    %186 = vmatprep.subr.mxu0 0.0
    %187 = vmatpush1.msra.mxu0 %v164
    %188 = vmatprep.subr.mxu0 0.0
    %189 = vmatpush1.msra.mxu0 %v165
    %190 = vmatprep.subr.mxu0 0.0
    %191 = vmatpush1.msra.mxu0 %v166
    %192 = vmatprep.subr.mxu0 0.0
    %193 = vmatpush1.msra.mxu0 %v167
    %194 = vmatprep.subr.mxu0 0.0
    %195 = vmatpush1.msra.mxu0 %v168
    %196 = vmatprep.subr.mxu0 0.0
    %197 = vmatpush1.msra.mxu0 %v169
    %198 = vmatprep.subr.mxu0 0.0
    %199 = vmatpush1.msra.mxu0 %v170
    %200 = vmatprep.subr.mxu0 0.0
    %201 = vmatpush1.msra.mxu0 0.0
    %202 = vmatprep.subr.mxu0 0.0
    %203 = vmatpush1.msra.mxu0 0.0
    %204 = vmatprep.subr.mxu0 0.0
    %205 = vmatpush1.msra.mxu0 0.0
    %206 = vmatprep.subr.mxu0 0.0
    %207 = vmatpush1.msra.mxu0 0.0
    %208 = vmatprep.subr.mxu0 0.0
    %209 = vmatpush1.msra.mxu0 0.0
    %210 = vmatprep.subr.mxu0 0.0
    %211 = vmatpush1.msra.mxu0 0.0
    %212 = vmatprep.subr.mxu0 0.0
    %213 = vmatpush1.msra.mxu0 0.0
    %214 = vmatprep.subr.mxu0 0.0
    %215 = vmatpush1.msra.mxu0 0.0
    %216 = vmatprep.subr.mxu0 0.0
    %217 = vmatpush1.msra.mxu0 0.0
    %218 = vmatprep.subr.mxu0 0.0
    %219 = vmatpush1.msra.mxu0 0.0
    %220 = vmatprep.subr.mxu0 0.0
    %221 = vmatpush1.msra.mxu0 0.0
    %222 = vmatprep.subr.mxu0 0.0
    %223 = vmatpush1.msra.mxu0 0.0
    %224 = vmatprep.subr.mxu0 0.0
    %225 = vmatpush1.msra.mxu0 0.0
    %226 = vmatprep.subr.mxu0 0.0
    %227 = vmatpush1.msra.mxu0 0.0
    %228 = vmatprep.subr.mxu0 0.0
    %229 = vmatpush1.msra.mxu0 0.0
    %230 = vmatprep.subr.mxu0 0.0
    %231 = vmatpush1.msra.mxu0 0.0
    %232 = vmatprep.subr.mxu0 0.0
    %233 = vmatpush1.msra.mxu0 0.0
    %234 = vmatprep.subr.mxu0 0.0
    %235 = vmatpush1.msra.mxu0 0.0
    %236 = vmatprep.subr.mxu0 0.0
    %237 = vmatpush1.msra.mxu0 0.0
    %238 = vmatprep.subr.mxu0 0.0
    %239 = vmatpush1.msra.mxu0 0.0
    %240 = vmatprep.subr.mxu0 0.0
    %241 = vmatpush1.msra.mxu0 0.0
    %242 = vmatprep.subr.mxu0 0.0
    %243 = vmatpush1.msra.mxu0 0.0
    %244 = vmatprep.subr.mxu0 0.0
    %245 = vmatpush1.msra.mxu0 0.0
    %246 = vmatprep.subr.mxu0 0.0
    %247 = vmatpush1.msra.mxu0 0.0
    %248 = vmatprep.mubr.f32.mxu0 0.0
    %249 = vmatmul.mubr.f32.gmra.mrb[0].mxu0 %v173
    %v250 = vpop.f32.mrb[0].mxu0
    %v251 = vadd.f32 0.0, %v250
    %v252 = vpop.f32.mrb[0].mxu0
    %253 = vmatprep.mubr.f32.mxu0 0.0
    %254 = vmatmul.mubr.f32.gmra.mrb[0].mxu0 %v176
    %v255 = vpop.f32.mrb[0].mxu0
    %v256 = vadd.f32 0.0, %v255
    %v257 = vpop.f32.mrb[0].mxu0
    %258 = vmatprep.mubr.f32.mxu0 0.0
    %259 = vmatmul.mubr.f32.gmra.mrb[0].mxu0 %v179
    %v260 = vpop.f32.mrb[0].mxu0
    %v261 = vadd.f32 0.0, %v260
    %v262 = vpop.f32.mrb[0].mxu0
    %263 = vmatprep.mubr.f32.mxu0 0.0
    %264 = vmatmul.mubr.f32.gmra.mrb[0].mxu0 %v182
    %v265 = vpop.f32.mrb[0].mxu0
    %v266 = vadd.f32 0.0, %v265
    %v267 = vpop.f32.mrb[0].mxu0
    %268 = vdwg.mxu0
    %269 = vst.msk [vmem:[#allocation2] sm:$0xff] %vm45, %v251
    %270 = vst.msk [vmem:[#allocation2 + $0x8] sm:$0xff] %vm45, %v256
    %271 = vst.msk [vmem:[#allocation2 + $0x10] sm:$0xff] %vm45, %v261
    %272 = vst.msk [vmem:[#allocation2 + $0x18] sm:$0xff] %vm45, %v266
    // Predicated region
    $region22: #{mlp_forward.1} parent=1 // pred_check
      _
    $region23: #{mlp_forward.1} parent=1 // pred_check_branch
      %274 = sbr.rel (0) target = $region25
    $region24: #{mlp_forward.1} parent=1 // pred_region
      %s276 = ssub.s32 512, 512
      %277 = vsyncadd [#allocation3], %s276
      %s278 = sshll.u32 [#allocation2], 4
      %s279 = int_to_ptr.vmem [resolvable:$true] %s278
      %284 = dma.vmem_to_hbm [thread:$0]  %s279, 512, %s5, [#allocation3], 128, 128, 8
    $region25: #{mlp_forward.1} parent=1 // pred_fallthru
      _
    // Predicated region
    $region26: #{mlp_forward.1} parent=1 // pred_check
      _
    $region27: #{mlp_forward.1} parent=1 // pred_check_branch
      %286 = sbr.rel (0) target = $region29
    $region28: #{mlp_forward.1} parent=1 // pred_region
      %287 = dma.done [#allocation3], 512
    $region29: #{mlp_forward.1} parent=1 // pred_fallthru
      _
    %288 = vsyncpa [#allocation3], 1

</llo_original>
